<compile_context>
chip_gen: v7x
topology: tpu7x:2x2x1
jax: 0.10.0
libtpu: 0.0.40
codegen_flags: <defaults>
</compile_context>

<pallas_src>
import math

import jax
import jax.numpy as jnp
from jax.experimental import pallas as pl
from jax.experimental.pallas import tpu as pltpu

NEG_SLOPE = 0.2      # atten_neg_slope (LeakyReLU); dead under the [0.001, 5] clamp,
                     # kept only for the pure-JAX reference.
CLAMP_MIN = 0.001
CLAMP_MAX = 5.0


def _round_up(x, m):
    return (x + m - 1) // m * m


def _transform_kernel(x_ref, w_ref, b_ref, asrc_ref, adst_ref,
                      xpd_ref, ssrc_ref, sdst_ref):
    """xp = X @ [W | 0] + [b | 1 | 0]; emit bf16 xp, s_src row, s_dst column."""
    xp = jnp.dot(x_ref[...], w_ref[...],
                 preferred_element_type=jnp.float32) + b_ref[...]        # (Tn, Cp) f32
    # bf16 copy is the RHS of the aggregation matmul (halves its HBM/VMEM stream,
    # full-rate bf16 MXU on all chips).
    xpd_ref[...] = xp.astype(xpd_ref.dtype)
    # Per-vertex attention logits; a_src / a_dst are zero-padded beyond C_out so
    # the ones/padding columns of xp do not contribute.
    sdst_ref[...] = jnp.dot(xp, adst_ref[...],
                            preferred_element_type=jnp.float32)          # (Tn, 1)
    # s_src directly in lane-dense row layout (1, Tn) via an NT contraction, so
    # kernel 2 broadcasts it over lanes with no transpose.
    ssrc_ref[...] = jax.lax.dot_general(
        asrc_ref[...], xp, (((1,), (1,)), ((), ())),
        preferred_element_type=jnp.float32)                              # (1, Tn)


def _make_agg_kernel(tile_src, xp_resident):
    def _agg_kernel(sdst_ref, ssrc_ref, xps_ref, adj_ref, sel_ref, out_ref):
        k = pl.program_id(1)

        @pl.when(k == 0)
        def _init():
            out_ref[...] = jnp.zeros_like(out_ref)

        # scores[d, s] = clamp(LeakyReLU(s_dst[d] + s_src[s]), 0.001, 5)
        #              = clamp(s_dst[d] + s_src[s], 0.001, 5)   (LeakyReLU is dead
        # code under the clamp: its negative branch is always lifted to CLAMP_MIN).
        sc = jnp.clip(sdst_ref[...] + ssrc_ref[...], CLAMP_MIN, CLAMP_MAX)
        # Clamp bounds exp() away from overflow => masked softmax is a plain
        # streamed sum of e = exp(score) * adj (no row-max, no NEG_INF select).
        # TODO(synk): attention dropout omitted (eval-mode identity; no RNG here).
        e = (jnp.exp(sc) * adj_ref[...].astype(jnp.float32)).astype(jnp.bfloat16)

        if xp_resident:
            start = pl.multiple_of(k * tile_src, tile_src)
            xps = xps_ref[pl.ds(start, tile_src), :]      # slice of VMEM-resident xp
        else:
            xps = xps_ref[...]                            # streamed (tile_src, Cp) tile

        # One MXU matmul accumulates both the weighted feature sum (cols [:Cout])
        # and the softmax denominator (constant-ones column of xp) into out_ref,
        # which stays VMEM-resident across the src axis (index_map ignores k).
        out_ref[...] += jnp.dot(e, xps, preferred_element_type=jnp.float32)

        @pl.when(k == pl.num_programs(1) - 1)
        def _finalize():
            acc = out_ref[...]
            # Extract the ones-column (denominator) with a tiny selector matmul
            # (avoids a cross-lane extract).
            denom = jnp.dot(acc, sel_ref[...],
                            preferred_element_type=jnp.float32)          # (Td, 1)
            inv = pl.reciprocal(jnp.maximum(denom, 1e-12), approx=True)
            agg = acc * inv                                # normalize AFTER the matmul
            # Final activation: ELU (is_last=False, use_bn=False).
            out_ref[...] = jnp.where(
                agg > 0.0, agg, jnp.exp(jnp.minimum(agg, 0.0)) - 1.0
            ).astype(out_ref.dtype)

    return _agg_kernel


def _auto_config():
    """Per-generation defaults: int8 adj + 100 MiB VMEM limit on the HBM-bound
    128-MiB-VMEM parts (v4/v5e/v6e); bf16 adj + 48 MiB limit on v7x (64 MiB/TC)."""
    try:
        kind = jax.devices()[0].device_kind.lower()
    except Exception:
        kind = ""
    big_vmem = any(v in kind for v in ("v4", "v5", "v6"))
    adj_dtype = jnp.int8 if big_vmem else jnp.bfloat16
    vmem_limit = (100 if big_vmem else 48) * 1024 * 1024
    return adj_dtype, vmem_limit


def gat_conv(x, w, b, a_src, a_dst, adj, *,
             tile_n=1024, tile_dst=512, tile_src=1024,
             adj_dtype=None, xp_resident=None, vmem_limit_bytes=None):
    """GATConv forward.

    x:(N,Cin) f32, w:(Cin,Cout) f32, b:(Cout,), a_src:(Cout,), a_dst:(Cout,),
    adj:(N,N) with adj[dst,src]!=0 for an edge src->dst.  Returns (N,Cout) f32.
    """
    N, Cin = x.shape
    Cout = w.shape[1]
    f32, bf16 = jnp.float32, jnp.bfloat16

    auto_adj, auto_vmem = _auto_config()
    if adj_dtype is None:
        adj_dtype = auto_adj
    if vmem_limit_bytes is None:
        vmem_limit_bytes = auto_vmem

    # Clamp tiles to the (128-rounded) problem size so small graphs don't over-pad;
    # default tiles keep lcm == max(tile) so the quadratic adj padding stays small.
    n128 = _round_up(N, 128)
    tile_n = min(tile_n, n128)
    tile_dst = min(tile_dst, n128)
    tile_src = min(tile_src, n128)
    assert tile_n % 128 == 0 and tile_dst % 128 == 0 and tile_src % 128 == 0
    Np = _round_up(N, math.lcm(tile_n, tile_dst, tile_src))

    # Lane-dense feature width: Cout columns + one constant-ones column (softmax
    # denominator), padded to 128.
    # TODO(synk): when Cout % 128 == 0 this adds a whole extra 128-lane block; a
    # separate (Ts,1) ones-vector matmul for the denominator would avoid that.
    Cp = _round_up(Cout + 1, 128)
    ONES_COL = Cout

    if xp_resident is None:
        # Hold bf16 xp in VMEM for the whole grid when it is modest: kills the
        # Np*Cp*2*(Np/tile_dst) byte re-stream.  <=8 MiB (x2 buffers worst case)
        # fits every generation, including v7x's 64 MiB/TC.
        xp_resident = Np * Cp * 2 <= 8 * 1024 * 1024

    # ---- parameter / input padding (lane-dense layouts) ----
    x_p = jnp.pad(x.astype(f32), ((0, Np - N), (0, 0)))
    adj_p = jnp.pad(adj.astype(adj_dtype), ((0, Np - N), (0, Np - N)))
    w_pad = jnp.zeros((Cin, Cp), f32).at[:, :Cout].set(w.astype(f32))
    b_aug = (jnp.zeros((1, Cp), f32)
             .at[0, :Cout].set(b.astype(f32))
             .at[0, ONES_COL].set(1.0))
    asrc_row = jnp.zeros((1, Cp), f32).at[0, :Cout].set(a_src.astype(f32))
    adst_col = jnp.zeros((Cp, 1), f32).at[:Cout, 0].set(a_dst.astype(f32))
    sel_ones = jnp.zeros((Cp, 1), f32).at[ONES_COL, 0].set(1.0)

    # ---- kernel 1: feature transform + attention logits ----
    xpd, s_src_row, s_dst_col = pl.pallas_call(
        _transform_kernel,
        out_shape=(
            jax.ShapeDtypeStruct((Np, Cp), bf16),    # xp (+ ones column), bf16
            jax.ShapeDtypeStruct((1, Np), f32),      # s_src, lane-dense row layout
            jax.ShapeDtypeStruct((Np, 1), f32),      # s_dst, column layout
        ),
        grid=(Np // tile_n,),
        in_specs=[
            pl.BlockSpec((tile_n, Cin), lambda i: (i, 0)),
            pl.BlockSpec((Cin, Cp), lambda i: (0, 0)),
            pl.BlockSpec((1, Cp), lambda i: (0, 0)),
            pl.BlockSpec((1, Cp), lambda i: (0, 0)),
            pl.BlockSpec((Cp, 1), lambda i: (0, 0)),
        ],
        out_specs=(
            pl.BlockSpec((tile_n, Cp), lambda i: (i, 0)),
            pl.BlockSpec((1, tile_n), lambda i: (0, i)),
            pl.BlockSpec((tile_n, 1), lambda i: (i, 0)),
        ),
        compiler_params=pltpu.CompilerParams(dimension_semantics=("parallel",)),
    )(x_p, w_pad, b_aug, asrc_row, adst_col)

    # ---- kernel 2: tiled masked-softmax aggregation (dst parallel, src reduction) ----
    if xp_resident:
        xp_spec = pl.BlockSpec((Np, Cp), lambda i, k: (0, 0))         # VMEM-resident
    else:
        xp_spec = pl.BlockSpec((tile_src, Cp), lambda i, k: (k, 0))   # streamed

    out_full = pl.pallas_call(
        _make_agg_kernel(tile_src, xp_resident),
        out_shape=jax.ShapeDtypeStruct((Np, Cp), f32),
        grid=(Np // tile_dst, Np // tile_src),
        in_specs=[
            pl.BlockSpec((tile_dst, 1), lambda i, k: (i, 0)),          # s_dst column
            pl.BlockSpec((1, tile_src), lambda i, k: (0, k)),          # s_src row
            xp_spec,                                                   # xp (bf16)
            pl.BlockSpec((tile_dst, tile_src), lambda i, k: (i, k)),   # adj mask
            pl.BlockSpec((Cp, 1), lambda i, k: (0, 0)),                # ones-col selector
        ],
        out_specs=pl.BlockSpec((tile_dst, Cp), lambda i, k: (i, 0)),   # doubles as acc
        compiler_params=pltpu.CompilerParams(
            dimension_semantics=("parallel", "arbitrary"),
            vmem_limit_bytes=vmem_limit_bytes,
        ),
    )(s_dst_col, s_src_row, xpd, adj_p, sel_ones)

    return out_full[:N, :Cout]


if __name__ == "__main__":
    N_V, C_IN, C_OUT = 384, 16, 32
    key = jax.random.PRNGKey(0)
    k1, k2, k3, k4, k5, k6 = jax.random.split(key, 6)

    x = jax.random.normal(k1, (N_V, C_IN), jnp.float32)
    # nn.Linear weight is (out, in); transpose for X @ W.
    w = (jax.random.normal(k2, (C_OUT, C_IN), jnp.float32) / jnp.sqrt(C_IN)).T
    b = jax.random.normal(k3, (C_OUT,), jnp.float32) * 0.1
    a_src = jax.random.normal(k4, (C_OUT,), jnp.float32) / jnp.sqrt(C_OUT)
    a_dst = jax.random.normal(k5, (C_OUT,), jnp.float32) / jnp.sqrt(C_OUT)

    # Deterministic random directed graph; adj[dst, src] = 1.  Self loops ensure
    # every destination has at least one incoming edge.
    adj = (jax.random.uniform(k6, (N_V, N_V)) < 0.15).astype(jnp.float32)
    adj = jnp.maximum(adj, jnp.eye(N_V, dtype=jnp.float32))

    # Pure-JAX reference of the module forward, mirroring the kernel's mixed
    # precision (bf16 operands for the aggregation matmul, f32 accumulation).
    hi = jax.lax.Precision.HIGHEST
    xp = jnp.dot(x, w, precision=hi) + b[None, :]
    s_src = jnp.dot(xp, a_src, precision=hi)
    s_dst = jnp.dot(xp, a_dst, precision=hi)
    sc = s_dst[:, None] + s_src[None, :]
    sc = jnp.where(sc >= 0, sc, NEG_SLOPE * sc)          # module's LeakyReLU
    sc = jnp.clip(sc, CLAMP_MIN, CLAMP_MAX)
    e = jnp.where(adj > 0, jnp.exp(sc), 0.0).astype(jnp.bfloat16)
    num = jnp.dot(e, xp.astype(jnp.bfloat16), preferred_element_type=jnp.float32)
    den = jnp.dot(e, jnp.ones((N_V, 1), jnp.bfloat16), preferred_element_type=jnp.float32)
    agg = num / jnp.maximum(den, 1e-12)
    ref = jnp.where(agg > 0, agg, jnp.exp(jnp.minimum(agg, 0.0)) - 1.0)

    # Small tiles so the 2-D (dst, src) grid, the lcm padding (Np=512 > N=384),
    # and BOTH adj-dtype / xp-residency code paths are exercised at demo size.
    configs = [
        dict(adj_dtype=jnp.int8, xp_resident=True),       # v4/v5e/v6e-style path
        dict(adj_dtype=jnp.bfloat16, xp_resident=False),   # v7x-style path
    ]
    for cfg in configs:
        out = gat_conv(x, w, b, a_src, a_dst, adj,
                       tile_n=128, tile_dst=128, tile_src=256, **cfg)
        out = jax.block_until_ready(out)
        assert out.shape == (N_V, C_OUT)
        max_err = float(jnp.max(jnp.abs(out - ref)))
        # bf16 aggregation path + approx reciprocal -> modest tolerance.
        assert jnp.allclose(out, ref, atol=2e-2, rtol=2e-2), (cfg, max_err)

    print("KERNEL_OK")
</pallas_src>

<mosaic_0001>
module attributes {stable_mosaic.version = 11 : i64} {
  func.func @_transform_kernel(%arg0: i32, %arg1: memref<128x16xf32, #tpu.memory_space<vmem>>, %arg2: memref<16x128xf32, #tpu.memory_space<vmem>>, %arg3: memref<1x128xf32, #tpu.memory_space<vmem>>, %arg4: memref<1x128xf32, #tpu.memory_space<vmem>>, %arg5: memref<128x1xf32, #tpu.memory_space<vmem>>, %arg6: memref<128x128xbf16, #tpu.memory_space<vmem>>, %arg7: memref<1x128xf32, #tpu.memory_space<vmem>>, %arg8: memref<128x1xf32, #tpu.memory_space<vmem>>) attributes {dimension_semantics = [#tpu.dimension_semantics<parallel>], iteration_bounds = array<i64: 4>, scalar_prefetch = 0 : i64, scratch_operands = 0 : i64, tpu.core_type = #tpu.core_type<tc>, window_params = [{transform_indices = @transform_0, window_bounds = array<i64: 128, 16>}, {pipeline_mode = #tpu.pipeline_mode<synchronous>, transform_indices = @transform_1, window_bounds = array<i64: 16, 128>}, {pipeline_mode = #tpu.pipeline_mode<synchronous>, transform_indices = @transform_2, window_bounds = array<i64: 1, 128>}, {pipeline_mode = #tpu.pipeline_mode<synchronous>, transform_indices = @transform_3, window_bounds = array<i64: 1, 128>}, {pipeline_mode = #tpu.pipeline_mode<synchronous>, transform_indices = @transform_4, window_bounds = array<i64: 128, 1>}, {transform_indices = @transform_5, window_bounds = array<i64: 128, 128>}, {transform_indices = @transform_6, window_bounds = array<i64: 1, 128>}, {transform_indices = @transform_7, window_bounds = array<i64: 128, 1>}]} {
    %c0 = arith.constant 0 : index
    %c0_0 = arith.constant 0 : index
    %0 = vector.load %arg1[%c0, %c0_0] : memref<128x16xf32, #tpu.memory_space<vmem>>, vector<128x16xf32>
    %c0_1 = arith.constant 0 : index
    %c0_2 = arith.constant 0 : index
    %1 = vector.load %arg2[%c0_1, %c0_2] : memref<16x128xf32, #tpu.memory_space<vmem>>, vector<16x128xf32>
    %cst = arith.constant dense<0.000000e+00> : vector<128x128xf32>
    %2 = tpu.matmul %0, %1, %cst {dimension_numbers = #tpu.dot_dimension_numbers<[1], [0], [0], [1], [0, 0, 1, 1], [], []>} : vector<128x16xf32>, vector<16x128xf32>, vector<128x128xf32> -> vector<128x128xf32>
    %c0_3 = arith.constant 0 : index
    %c0_4 = arith.constant 0 : index
    %3 = vector.load %arg3[%c0_3, %c0_4] : memref<1x128xf32, #tpu.memory_space<vmem>>, vector<1x128xf32>
    %4 = vector.broadcast %3 : vector<1x128xf32> to vector<128x128xf32>
    %5 = arith.addf %2, %4 : vector<128x128xf32>
    %6 = arith.truncf %5 : vector<128x128xf32> to vector<128x128xbf16>
    %c0_5 = arith.constant 0 : index
    %c0_6 = arith.constant 0 : index
    %7 = vector.load %arg6[%c0_5, %c0_6] : memref<128x128xbf16, #tpu.memory_space<vmem>>, vector<128x128xbf16>
    tpu.vector_store %arg6[%c0_5, %c0_6], %6 {strides = array<i32>} : memref<128x128xbf16, #tpu.memory_space<vmem>>, vector<128x128xbf16>,
    %c0_7 = arith.constant 0 : index
    %c0_8 = arith.constant 0 : index
    %8 = vector.load %arg5[%c0_7, %c0_8] : memref<128x1xf32, #tpu.memory_space<vmem>>, vector<128x1xf32>
    %cst_9 = arith.constant dense<0.000000e+00> : vector<128x1xf32>
    %9 = tpu.matmul %5, %8, %cst_9 {dimension_numbers = #tpu.dot_dimension_numbers<[1], [0], [0], [1], [0, 0, 1, 1], [], []>} : vector<128x128xf32>, vector<128x1xf32>, vector<128x1xf32> -> vector<128x1xf32>
    %c0_10 = arith.constant 0 : index
    %c0_11 = arith.constant 0 : index
    %10 = vector.load %arg8[%c0_10, %c0_11] : memref<128x1xf32, #tpu.memory_space<vmem>>, vector<128x1xf32>
    tpu.vector_store %arg8[%c0_10, %c0_11], %9 {strides = array<i32>} : memref<128x1xf32, #tpu.memory_space<vmem>>, vector<128x1xf32>,
    %c0_12 = arith.constant 0 : index
    %c0_13 = arith.constant 0 : index
    %11 = vector.load %arg4[%c0_12, %c0_13] : memref<1x128xf32, #tpu.memory_space<vmem>>, vector<1x128xf32>
    %cst_14 = arith.constant dense<0.000000e+00> : vector<1x128xf32>
    %12 = tpu.matmul %11, %5, %cst_14 {dimension_numbers = #tpu.dot_dimension_numbers<[1], [1], [0], [0], [0, 0, 1, 0], [], []>} : vector<1x128xf32>, vector<128x128xf32>, vector<1x128xf32> -> vector<1x128xf32>
    %c0_15 = arith.constant 0 : index
    %c0_16 = arith.constant 0 : index
    %13 = vector.load %arg7[%c0_15, %c0_16] : memref<1x128xf32, #tpu.memory_space<vmem>>, vector<1x128xf32>
    tpu.vector_store %arg7[%c0_15, %c0_16], %12 {strides = array<i32>} : memref<1x128xf32, #tpu.memory_space<vmem>>, vector<1x128xf32>,
    return
  }
  func.func @transform_0(%arg0: i32) -> (i32, i32) {
    %c0_i32 = arith.constant 0 : i32
    %c0_i32_0 = arith.constant 0 : i32
    return %arg0, %c0_i32 : i32, i32
  }
  func.func @transform_1(%arg0: i32) -> (i32, i32) {
    %c0_i32 = arith.constant 0 : i32
    %c0_i32_0 = arith.constant 0 : i32
    %c0_i32_1 = arith.constant 0 : i32
    return %c0_i32, %c0_i32_0 : i32, i32
  }
  func.func @transform_2(%arg0: i32) -> (i32, i32) {
    %c0_i32 = arith.constant 0 : i32
    %c0_i32_0 = arith.constant 0 : i32
    %c0_i32_1 = arith.constant 0 : i32
    return %c0_i32, %c0_i32_0 : i32, i32
  }
  func.func @transform_3(%arg0: i32) -> (i32, i32) {
    %c0_i32 = arith.constant 0 : i32
    %c0_i32_0 = arith.constant 0 : i32
    %c0_i32_1 = arith.constant 0 : i32
    return %c0_i32, %c0_i32_0 : i32, i32
  }
  func.func @transform_4(%arg0: i32) -> (i32, i32) {
    %c0_i32 = arith.constant 0 : i32
    %c0_i32_0 = arith.constant 0 : i32
    %c0_i32_1 = arith.constant 0 : i32
    return %c0_i32, %c0_i32_0 : i32, i32
  }
  func.func @transform_5(%arg0: i32) -> (i32, i32) {
    %c0_i32 = arith.constant 0 : i32
    %c0_i32_0 = arith.constant 0 : i32
    return %arg0, %c0_i32 : i32, i32
  }
  func.func @transform_6(%arg0: i32) -> (i32, i32) {
    %c0_i32 = arith.constant 0 : i32
    %c0_i32_0 = arith.constant 0 : i32
    return %c0_i32, %arg0 : i32, i32
  }
  func.func @transform_7(%arg0: i32) -> (i32, i32) {
    %c0_i32 = arith.constant 0 : i32
    %c0_i32_0 = arith.constant 0 : i32
    return %arg0, %c0_i32 : i32, i32
  }
}

</mosaic_0001>

<llo_original>
// kernel: tpu_custom_call.1
$region0: #{tpu_custom_call.1}
  #allocation0 [shape = 'u32[]', space=smem, size = 0x4, offset = 0x4, fixed_abs, tag = 'smem constant byte address 0x4 - core index']
  #allocation1 [shape = 'u32[144,128]{1,0:T(1,128)}', space=vmem, size = 0x12000, scoped, tag = 'internal scratch']
  %s0 = inlined_call_operand.vmem [shape: f32[512,16], index: 0, kind: input, shape index: {}]
  %s1 = inlined_call_operand.vmem [shape: f32[16,128], index: 1, kind: input, shape index: {}]
  %s2 = inlined_call_operand.vmem [shape: f32[1,128], index: 2, kind: input, shape index: {}]
  %s3 = inlined_call_operand.vmem [shape: f32[1,128], index: 3, kind: input, shape index: {}]
  %s4 = inlined_call_operand.vmem [shape: f32[128,1], index: 4, kind: input, shape index: {}]
  %s5 = inlined_call_operand.hbm [shape: bf16[512,128], index: 5, kind: output, shape index: {0}]
  %s6 = inlined_call_operand.hbm [shape: f32[1,512], index: 6, kind: output, shape index: {1}]
  %s7 = inlined_call_operand.vmem [shape: f32[512,1], index: 7, kind: output, shape index: {2}]
  %8 = xla_tuple %s5, %s6, %s7
  %s9 = sld [smem:[#allocation0]]
  $region69: #{tpu_custom_call.1} parent=0
    _
  %s11 = ssub.s32 1, %s9
  %s12 = scalar_select 0, %s11, %s9
  $region1: #{tpu_custom_call.1} parent=0
    #allocation2 [shape = 'u8[65536]{0}', space=vmem, size = 0x10000, scoped, tag = 'output window, operand 0']
    #allocation3 [shape = 's32[2]{0}', space=sflag, size = 0x8, scoped, tag = 'scoped memory for tpu_custom_call.1']
    #allocation4 [shape = 'u8[1024]{0}', space=vmem, size = 0x400, scoped, tag = 'output window, operand 1']
    #allocation5 [shape = 's32[2]{0}', space=sflag, size = 0x8, scoped, tag = 'scoped memory for tpu_custom_call.1']
    %13 = vsyncpa [#allocation3], 0
    %s14 = scalar_lea.sflag [#allocation3], 1
    %15 = vsyncpa %s14, 0
    %16 = vsyncpa [#allocation5], 0
    %s17 = scalar_lea.sflag [#allocation5], 1
    %18 = vsyncpa %s17, 0
    loop: start=0, step=1, limit=6
    $region2: #{tpu_custom_call.1} parent=1 // loop_pre_header
      _
    $region3: #{tpu_custom_call.1} parent=1 // loop_header
      %s20 = sphi 0, %s24
      %p21 = scmp.ge.s32.totalorder %s20, 6
      %s30 = sphi 0, %s32
      %s33 = sphi 0, %s30
      %s34 = sphi 0, %s33
      %s50 = sphi 0, %s34
      %s54 = sphi 0, %s54
      %s56 = sphi 0, %s54
      %s57 = sphi 0, %s56
      %s71 = sphi 0, %s57
      %s75 = sphi 0, %s75
      %s77 = sphi 0, %s75
      %s78 = sphi 0, %s77
      %s92 = sphi 0, %s78
      %s96 = sphi 0, %s96
      %s98 = sphi 0, %s96
      %s99 = sphi 0, %s98
      %s113 = sphi 0, %s99
      %s117 = sphi 0, %s117
      %s119 = sphi 0, %s117
      %s120 = sphi 0, %s119
      %s134 = sphi 0, %s120
      %s140 = sphi 0, %s142
      %s143 = sphi 0, %s140
      %s144 = sphi 0, %s143
      %s160 = sphi 0, %s144
      %s166 = sphi 0, %s168
      %s169 = sphi 0, %s166
      %s170 = sphi 0, %s169
      %s186 = sphi 0, %s170
      %s192 = sphi 0, %s194
      %s195 = sphi 0, %s192
      %s196 = sphi 0, %s195
      %s212 = sphi 0, %s196
    $region4: #{tpu_custom_call.1} parent=1 // loop_header_branch
      %23 = sbr.rel (%p21) target = $region8
    $region5: #{tpu_custom_call.1} parent=1 // loop_body
      %s25 = ssub.s32 %s20, 1
      %s26 = ssub.s32 %s20, 2
      %s27 = sadd.s32 %s20, 1
      %s28 = ssub.s32 %s20, %s27
      %p29 = scmp.eq.s32.totalorder %s28, 0
      %s31 = sadd.s32 %s30, 1
      %s32 = scalar_select %p29, %s30, %s31
      %p35 = pneg %p29
      %p36 = scmp.eq.s32.totalorder %s20, 3
      %p37 = por %p35, %p36
      %p38 = scmp.ne.s32.totalorder %s30, %s33
      %p39 = scmp.eq.s32.totalorder %s20, 0
      %p40 = por %p38, %p39
      %p41 = scmp.ne.s32.totalorder %s30, %s33
      %p42 = scmp.eq.s32.totalorder %s25, 3
      %p43 = por %p41, %p42
      %p44 = scmp.ne.s32.totalorder %s33, %s34
      %p45 = scmp.eq.s32.totalorder %s25, 0
      %p46 = por %p44, %p45
      %p47 = scmp.ne.s32.totalorder %s33, %s34
      %p48 = scmp.eq.s32.totalorder %s26, 3
      %p49 = por %p47, %p48
      %p51 = scmp.ne.s32.totalorder %s34, %s50
      %p52 = scmp.eq.s32.totalorder %s26, 0
      %p53 = por %p51, %p52
      %s55 = sadd.s32 %s54, 1
      %p58 = scmp.eq.s32.totalorder %s20, 3
      %p59 = scmp.ne.s32.totalorder %s54, %s56
      %p60 = scmp.eq.s32.totalorder %s20, 0
      %p61 = por %p59, %p60
      %p62 = scmp.ne.s32.totalorder %s54, %s56
      %p63 = scmp.eq.s32.totalorder %s25, 3
      %p64 = por %p62, %p63
      %p65 = scmp.ne.s32.totalorder %s56, %s57
      %p66 = scmp.eq.s32.totalorder %s25, 0
      %p67 = por %p65, %p66
      %p68 = scmp.ne.s32.totalorder %s56, %s57
      %p69 = scmp.eq.s32.totalorder %s26, 3
      %p70 = por %p68, %p69
      %p72 = scmp.ne.s32.totalorder %s57, %s71
      %p73 = scmp.eq.s32.totalorder %s26, 0
      %p74 = por %p72, %p73
      %s76 = sadd.s32 %s75, 1
      %p79 = scmp.eq.s32.totalorder %s20, 3
      %p80 = scmp.ne.s32.totalorder %s75, %s77
      %p81 = scmp.eq.s32.totalorder %s20, 0
      %p82 = por %p80, %p81
      %p83 = scmp.ne.s32.totalorder %s75, %s77
      %p84 = scmp.eq.s32.totalorder %s25, 3
      %p85 = por %p83, %p84
      %p86 = scmp.ne.s32.totalorder %s77, %s78
      %p87 = scmp.eq.s32.totalorder %s25, 0
      %p88 = por %p86, %p87
      %p89 = scmp.ne.s32.totalorder %s77, %s78
      %p90 = scmp.eq.s32.totalorder %s26, 3
      %p91 = por %p89, %p90
      %p93 = scmp.ne.s32.totalorder %s78, %s92
      %p94 = scmp.eq.s32.totalorder %s26, 0
      %p95 = por %p93, %p94
      %s97 = sadd.s32 %s96, 1
      %p100 = scmp.eq.s32.totalorder %s20, 3
      %p101 = scmp.ne.s32.totalorder %s96, %s98
      %p102 = scmp.eq.s32.totalorder %s20, 0
      %p103 = por %p101, %p102
      %p104 = scmp.ne.s32.totalorder %s96, %s98
      %p105 = scmp.eq.s32.totalorder %s25, 3
      %p106 = por %p104, %p105
      %p107 = scmp.ne.s32.totalorder %s98, %s99
      %p108 = scmp.eq.s32.totalorder %s25, 0
      %p109 = por %p107, %p108
      %p110 = scmp.ne.s32.totalorder %s98, %s99
      %p111 = scmp.eq.s32.totalorder %s26, 3
      %p112 = por %p110, %p111
      %p114 = scmp.ne.s32.totalorder %s99, %s113
      %p115 = scmp.eq.s32.totalorder %s26, 0
      %p116 = por %p114, %p115
      %s118 = sadd.s32 %s117, 1
      %p121 = scmp.eq.s32.totalorder %s20, 3
      %p122 = scmp.ne.s32.totalorder %s117, %s119
      %p123 = scmp.eq.s32.totalorder %s20, 0
      %p124 = por %p122, %p123
      %p125 = scmp.ne.s32.totalorder %s117, %s119
      %p126 = scmp.eq.s32.totalorder %s25, 3
      %p127 = por %p125, %p126
      %p128 = scmp.ne.s32.totalorder %s119, %s120
      %p129 = scmp.eq.s32.totalorder %s25, 0
      %p130 = por %p128, %p129
      %p131 = scmp.ne.s32.totalorder %s119, %s120
      %p132 = scmp.eq.s32.totalorder %s26, 3
      %p133 = por %p131, %p132
      %p135 = scmp.ne.s32.totalorder %s120, %s134
      %p136 = scmp.eq.s32.totalorder %s26, 0
      %p137 = por %p135, %p136
      %s138 = ssub.s32 %s20, %s27
      %p139 = scmp.eq.s32.totalorder %s138, 0
      %s141 = sadd.s32 %s140, 1
      %s142 = scalar_select %p139, %s140, %s141
      %p145 = pneg %p139
      %p146 = scmp.eq.s32.totalorder %s20, 3
      %p147 = por %p145, %p146
      %p148 = scmp.ne.s32.totalorder %s140, %s143
      %p149 = scmp.eq.s32.totalorder %s20, 0
      %p150 = por %p148, %p149
      %p151 = scmp.ne.s32.totalorder %s140, %s143
      %p152 = scmp.eq.s32.totalorder %s25, 3
      %p153 = por %p151, %p152
      %p154 = scmp.ne.s32.totalorder %s143, %s144
      %p155 = scmp.eq.s32.totalorder %s25, 0
      %p156 = por %p154, %p155
      %p157 = scmp.ne.s32.totalorder %s143, %s144
      %p158 = scmp.eq.s32.totalorder %s26, 3
      %p159 = por %p157, %p158
      %p161 = scmp.ne.s32.totalorder %s144, %s160
      %p162 = scmp.eq.s32.totalorder %s26, 0
      %p163 = por %p161, %p162
      %s164 = ssub.s32 %s20, %s27
      %p165 = scmp.eq.s32.totalorder %s164, 0
      %s167 = sadd.s32 %s166, 1
      %s168 = scalar_select %p165, %s166, %s167
      %p171 = pneg %p165
      %p172 = scmp.eq.s32.totalorder %s20, 3
      %p173 = por %p171, %p172
      %p174 = scmp.ne.s32.totalorder %s166, %s169
      %p175 = scmp.eq.s32.totalorder %s20, 0
      %p176 = por %p174, %p175
      %p177 = scmp.ne.s32.totalorder %s166, %s169
      %p178 = scmp.eq.s32.totalorder %s25, 3
      %p179 = por %p177, %p178
      %p180 = scmp.ne.s32.totalorder %s169, %s170
      %p181 = scmp.eq.s32.totalorder %s25, 0
      %p182 = por %p180, %p181
      %p183 = scmp.ne.s32.totalorder %s169, %s170
      %p184 = scmp.eq.s32.totalorder %s26, 3
      %p185 = por %p183, %p184
      %p187 = scmp.ne.s32.totalorder %s170, %s186
      %p188 = scmp.eq.s32.totalorder %s26, 0
      %p189 = por %p187, %p188
      %s190 = ssub.s32 %s20, %s27
      %p191 = scmp.eq.s32.totalorder %s190, 0
      %s193 = sadd.s32 %s192, 1
      %s194 = scalar_select %p191, %s192, %s193
      %p197 = pneg %p191
      %p198 = scmp.eq.s32.totalorder %s20, 3
      %p199 = por %p197, %p198
      %p200 = scmp.ne.s32.totalorder %s192, %s195
      %p201 = scmp.eq.s32.totalorder %s20, 0
      %p202 = por %p200, %p201
      %p203 = scmp.ne.s32.totalorder %s192, %s195
      %p204 = scmp.eq.s32.totalorder %s25, 3
      %p205 = por %p203, %p204
      %p206 = scmp.ne.s32.totalorder %s195, %s196
      %p207 = scmp.eq.s32.totalorder %s25, 0
      %p208 = por %p206, %p207
      %p209 = scmp.ne.s32.totalorder %s195, %s196
      %p210 = scmp.eq.s32.totalorder %s26, 3
      %p211 = por %p209, %p210
      %p213 = scmp.ne.s32.totalorder %s196, %s212
      %p214 = scmp.eq.s32.totalorder %s26, 0
      %p215 = por %p213, %p214
      %p216 = scmp.le.s32.totalorder 1, %s20
      %p217 = scmp.lt.s32.totalorder %s20, 5
      %p218 = pnand %p216, %p217
      %p219 = pneg %p218
      // Predicated region
      $region9: #{tpu_custom_call.1} parent=5 // pred_check
        _
      $region10: #{tpu_custom_call.1} parent=5 // pred_check_branch
        %221 = sbr.rel (%p218) target = $region12
      $region11: #{tpu_custom_call.1} parent=5 // pred_region
        %s222 = ssub.s32 %s20, 1
        // Predicated region
        $region13: #{tpu_custom_call.1} parent=11 // pred_check
          %p223 = pneg %p67
        $region14: #{tpu_custom_call.1} parent=11 // pred_check_branch
          %225 = sbr.rel (%p223) target = $region16
        $region15: #{tpu_custom_call.1} parent=11 // pred_region
          _
        $region16: #{tpu_custom_call.1} parent=11 // pred_fallthru
          _
        // Predicated region
        $region17: #{tpu_custom_call.1} parent=11 // pred_check
          %p226 = pneg %p88
        $region18: #{tpu_custom_call.1} parent=11 // pred_check_branch
          %228 = sbr.rel (%p226) target = $region20
        $region19: #{tpu_custom_call.1} parent=11 // pred_region
          _
        $region20: #{tpu_custom_call.1} parent=11 // pred_fallthru
          _
        // Predicated region
        $region21: #{tpu_custom_call.1} parent=11 // pred_check
          %p229 = pneg %p109
        $region22: #{tpu_custom_call.1} parent=11 // pred_check_branch
          %231 = sbr.rel (%p229) target = $region24
        $region23: #{tpu_custom_call.1} parent=11 // pred_region
          _
        $region24: #{tpu_custom_call.1} parent=11 // pred_fallthru
          _
        // Predicated region
        $region25: #{tpu_custom_call.1} parent=11 // pred_check
          %p232 = pneg %p130
        $region26: #{tpu_custom_call.1} parent=11 // pred_check_branch
          %234 = sbr.rel (%p232) target = $region28
        $region27: #{tpu_custom_call.1} parent=11 // pred_region
          _
        $region28: #{tpu_custom_call.1} parent=11 // pred_fallthru
          _
      $region12: #{tpu_custom_call.1} parent=5 // pred_fallthru
        _
      %p235 = scmp.lt.s32.totalorder %s20, 4
      // Predicated region
      $region29: #{tpu_custom_call.1} parent=5 // pred_check
        %p236 = pneg %p235
      $region30: #{tpu_custom_call.1} parent=5 // pred_check_branch
        %238 = sbr.rel (%p236) target = $region32
      $region31: #{tpu_custom_call.1} parent=5 // pred_region
        // Predicated region
        $region33: #{tpu_custom_call.1} parent=31 // pred_check
          %p239 = pneg %p40
        $region34: #{tpu_custom_call.1} parent=31 // pred_check_branch
          %241 = sbr.rel (%p239) target = $region36
        $region35: #{tpu_custom_call.1} parent=31 // pred_region
          %s242 = smul.u32 16, %s20
          %p243 = scmp.lt.s32.totalorder %s242, 63
          %s244 = scalar_select %p243, %s242, 63
          %s245 = smul.addr %s244, 8
          %s246 = scalar_lea.vmem %s0, %s245
          %s247 = smul.u32 16, %s20
        $region36: #{tpu_custom_call.1} parent=31 // pred_fallthru
          _
      $region32: #{tpu_custom_call.1} parent=5 // pred_fallthru
        _
      %p248 = scmp.le.s32.totalorder 1, %s20
      %p249 = scmp.lt.s32.totalorder %s20, 5
      %p250 = pnand %p248, %p249
      %p251 = pneg %p250
      // Predicated region
      $region37: #{tpu_custom_call.1} parent=5 // pred_check
        _
      $region38: #{tpu_custom_call.1} parent=5 // pred_check_branch
        %253 = sbr.rel (%p250) target = $region40
      $region39: #{tpu_custom_call.1} parent=5 // pred_region
        %s254 = ssub.s32 %s20, 1
        %s255 = smul.u32 16, %s25
        %p256 = scmp.lt.s32.totalorder %s255, 63
        %s257 = scalar_select %p256, %s255, 63
        %s258 = smul.addr %s257, 8
        %s259 = scalar_lea.vmem %s0, %s258
        %p260 = pneg %p46
        %p261 = pneg %p43
        %p262 = pneg %p67
        %p263 = pneg %p64
        %p264 = pneg %p88
        %p265 = pneg %p85
        %p266 = pneg %p109
        %p267 = pneg %p106
        %p268 = pneg %p130
        %p269 = pneg %p127
        %p270 = pneg %p156
        %p271 = pneg %p153
        %s272 = sand.u32 %s143, 1
        %s273 = scalar_lea.sflag [#allocation3], %s272
        %s274 = sand.u32 %s143, 1
        %s275 = smul.addr %s274, 64
        %s276 = scalar_lea.vmem [#allocation2], %s275
        %p277 = pneg %p182
        %p278 = pneg %p179
        %s279 = sand.u32 %s169, 1
        %s280 = scalar_lea.sflag [#allocation5], %s279
        %s281 = sand.u32 %s169, 1
        %s282 = scalar_lea.vmem [#allocation4], %s281
        %p283 = pneg %p208
        %p284 = pneg %p205
        %s285 = smul.u32 16, %s25
        %p286 = scmp.lt.s32.totalorder %s285, 63
        %s287 = scalar_select %p286, %s285, 63
        %s288 = smul.addr %s287, 8
        %s289 = scalar_lea.vmem %s7, %s288
        %s290 = smul.u32 16, %s25
        %p291 = scmp.lt.s32.totalorder %s290, 63
        %s292 = scalar_select %p291, %s290, 63
        %s293 = smul.addr %s292, 8
        %s294 = scalar_lea.vmem %s0, %s293
        %s295 = smul.u32 16, %s25
        %s296 = smul.u32 16, %s25
        %s297 = smul.u32 16, %s25
        %p298 = scmp.lt.s32.totalorder %s297, 63
        %s299 = scalar_select %p298, %s297, 63
        %s300 = smul.addr %s299, 8
        %s301 = scalar_lea.vmem %s7, %s300
        %s302 = smul.u32 16, %s25
        %v303 = vld [vmem:[%s294] sm:$0xff]
        %v304 = vld [vmem:[%s294 + $0x8] sm:$0xff]
        %v305 = vld [vmem:[%s294 + $0x10] sm:$0xff]
        %v306 = vld [vmem:[%s294 + $0x18] sm:$0xff]
        %v307 = vld [vmem:[%s294 + $0x20] sm:$0xff]
        %v308 = vld [vmem:[%s294 + $0x28] sm:$0xff]
        %v309 = vld [vmem:[%s294 + $0x30] sm:$0xff]
        %v310 = vld [vmem:[%s294 + $0x38] sm:$0xff]
        %v311 = vld [vmem:[%s294 + $0x40] sm:$0xff]
        %v312 = vld [vmem:[%s294 + $0x48] sm:$0xff]
        %v313 = vld [vmem:[%s294 + $0x50] sm:$0xff]
        %v314 = vld [vmem:[%s294 + $0x58] sm:$0xff]
        %v315 = vld [vmem:[%s294 + $0x60] sm:$0xff]
        %v316 = vld [vmem:[%s294 + $0x68] sm:$0xff]
        %v317 = vld [vmem:[%s294 + $0x70] sm:$0xff]
        %v318 = vld [vmem:[%s294 + $0x78] sm:$0xff]
        %v319 = vld [vmem:[%s1] sm:$0xff]
        %v320 = vld [vmem:[%s1 + $0x8] sm:$0xff]
        %v321 = vld [vmem:[%s2] sm:$0x1]
        %v323 = vlaneseq
        %v324 = vshrl.u32 %v323, 7
        %v325 = vsub.s32 0, %v324
        %v326 = vrot.slane %v321, %v325
        %vm328 = vcmask 130048
        %v330 = vsel %vm328, %v303, 0
        %v333 = vsel %vm328, %v304, 0
        %v336 = vsel %vm328, %v305, 0
        %v339 = vsel %vm328, %v306, 0
        %v342 = vsel %vm328, %v307, 0
        %v345 = vsel %vm328, %v308, 0
        %v348 = vsel %vm328, %v309, 0
        %v351 = vsel %vm328, %v310, 0
        %v354 = vsel %vm328, %v311, 0
        %v357 = vsel %vm328, %v312, 0
        %v360 = vsel %vm328, %v313, 0
        %v363 = vsel %vm328, %v314, 0
        %v366 = vsel %vm328, %v315, 0
        %v369 = vsel %vm328, %v316, 0
        %v372 = vsel %vm328, %v317, 0
        %v375 = vsel %vm328, %v318, 0
        %377 = vmatprep.subr.mxu0 0.0
        %378 = vmatpush1.msra.mxu0 %v319
        %379 = vmatprep.subr.mxu0 0.0
        %380 = vmatpush1.msra.mxu0 %v320
        %381 = vmatprep.subr.mxu0 0.0
        %382 = vmatpush1.msra.mxu0 0.0
        %383 = vmatprep.subr.mxu0 0.0
        %384 = vmatpush1.msra.mxu0 0.0
        %385 = vmatprep.subr.mxu0 0.0
        %386 = vmatpush1.msra.mxu0 0.0
        %387 = vmatprep.subr.mxu0 0.0
        %388 = vmatpush1.msra.mxu0 0.0
        %389 = vmatprep.subr.mxu0 0.0
        %390 = vmatpush1.msra.mxu0 0.0
        %391 = vmatprep.subr.mxu0 0.0
        %392 = vmatpush1.msra.mxu0 0.0
        %393 = vmatprep.subr.mxu0 0.0
        %394 = vmatpush1.msra.mxu0 0.0
        %395 = vmatprep.subr.mxu0 0.0
        %396 = vmatpush1.msra.mxu0 0.0
        %397 = vmatprep.subr.mxu0 0.0
        %398 = vmatpush1.msra.mxu0 0.0
        %399 = vmatprep.subr.mxu0 0.0
        %400 = vmatpush1.msra.mxu0 0.0
        %401 = vmatprep.subr.mxu0 0.0
        %402 = vmatpush1.msra.mxu0 0.0
        %403 = vmatprep.subr.mxu0 0.0
        %404 = vmatpush1.msra.mxu0 0.0
        %405 = vmatprep.subr.mxu0 0.0
        %406 = vmatpush1.msra.mxu0 0.0
        %407 = vmatprep.subr.mxu0 0.0
        %408 = vmatpush1.msra.mxu0 0.0
        %409 = vmatprep.subr.mxu0 0.0
        %410 = vmatpush1.msra.mxu0 0.0
        %411 = vmatprep.subr.mxu0 0.0
        %412 = vmatpush1.msra.mxu0 0.0
        %413 = vmatprep.subr.mxu0 0.0
        %414 = vmatpush1.msra.mxu0 0.0
        %415 = vmatprep.subr.mxu0 0.0
        %416 = vmatpush1.msra.mxu0 0.0
        %417 = vmatprep.subr.mxu0 0.0
        %418 = vmatpush1.msra.mxu0 0.0
        %419 = vmatprep.subr.mxu0 0.0
        %420 = vmatpush1.msra.mxu0 0.0
        %421 = vmatprep.subr.mxu0 0.0
        %422 = vmatpush1.msra.mxu0 0.0
        %423 = vmatprep.subr.mxu0 0.0
        %424 = vmatpush1.msra.mxu0 0.0
        %425 = vmatprep.subr.mxu0 0.0
        %426 = vmatpush1.msra.mxu0 0.0
        %427 = vmatprep.subr.mxu0 0.0
        %428 = vmatpush1.msra.mxu0 0.0
        %429 = vmatprep.subr.mxu0 0.0
        %430 = vmatpush1.msra.mxu0 0.0
        %431 = vmatprep.subr.mxu0 0.0
        %432 = vmatpush1.msra.mxu0 0.0
        %433 = vmatprep.subr.mxu0 0.0
        %434 = vmatpush1.msra.mxu0 0.0
        %435 = vmatprep.subr.mxu0 0.0
        %436 = vmatpush1.msra.mxu0 0.0
        %437 = vmatprep.subr.mxu0 0.0
        %438 = vmatpush1.msra.mxu0 0.0
        %439 = vmatprep.subr.mxu0 0.0
        %440 = vmatpush1.msra.mxu0 0.0
        %441 = vmatprep.mubr.f32.mxu0 0.0
        %442 = vmatmul.mubr.f32.gmra.mrb[0].mxu0 %v330
        %v443 = vpop.f32.mrb[0].mxu0
        %v444 = vadd.f32 %v326, %v443
        %v445 = vpop.f32.mrb[0].mxu0
        %446 = vmatprep.mubr.f32.mxu0 0.0
        %447 = vmatmul.mubr.f32.gmra.mrb[0].mxu0 %v333
        %v448 = vpop.f32.mrb[0].mxu0
        %v449 = vadd.f32 %v326, %v448
        %v450 = vpop.f32.mrb[0].mxu0
        %451 = vmatprep.mubr.f32.mxu0 0.0
        %452 = vmatmul.mubr.f32.gmra.mrb[0].mxu0 %v336
        %v453 = vpop.f32.mrb[0].mxu0
        %v454 = vadd.f32 %v326, %v453
        %v455 = vpop.f32.mrb[0].mxu0
        %456 = vmatprep.mubr.f32.mxu0 0.0
        %457 = vmatmul.mubr.f32.gmra.mrb[0].mxu0 %v339
        %v458 = vpop.f32.mrb[0].mxu0
        %v459 = vadd.f32 %v326, %v458
        %v460 = vpop.f32.mrb[0].mxu0
        %461 = vmatprep.mubr.f32.mxu0 0.0
        %462 = vmatmul.mubr.f32.gmra.mrb[0].mxu0 %v342
        %v463 = vpop.f32.mrb[0].mxu0
        %v464 = vadd.f32 %v326, %v463
        %v465 = vpop.f32.mrb[0].mxu0
        %466 = vmatprep.mubr.f32.mxu0 0.0
        %467 = vmatmul.mubr.f32.gmra.mrb[0].mxu0 %v345
        %v468 = vpop.f32.mrb[0].mxu0
        %v469 = vadd.f32 %v326, %v468
        %v470 = vpop.f32.mrb[0].mxu0
        %471 = vmatprep.mubr.f32.mxu0 0.0
        %472 = vmatmul.mubr.f32.gmra.mrb[0].mxu0 %v348
        %v473 = vpop.f32.mrb[0].mxu0
        %v474 = vadd.f32 %v326, %v473
        %v475 = vpop.f32.mrb[0].mxu0
        %476 = vmatprep.mubr.f32.mxu0 0.0
        %477 = vmatmul.mubr.f32.gmra.mrb[0].mxu0 %v351
        %v478 = vpop.f32.mrb[0].mxu0
        %v479 = vadd.f32 %v326, %v478
        %v480 = vpop.f32.mrb[0].mxu0
        %481 = vmatprep.mubr.f32.mxu0 0.0
        %482 = vmatmul.mubr.f32.gmra.mrb[0].mxu0 %v354
        %v483 = vpop.f32.mrb[0].mxu0
        %v484 = vadd.f32 %v326, %v483
        %v485 = vpop.f32.mrb[0].mxu0
        %486 = vmatprep.mubr.f32.mxu0 0.0
        %487 = vmatmul.mubr.f32.gmra.mrb[0].mxu0 %v357
        %v488 = vpop.f32.mrb[0].mxu0
        %v489 = vadd.f32 %v326, %v488
        %v490 = vpop.f32.mrb[0].mxu0
        %491 = vmatprep.mubr.f32.mxu0 0.0
        %492 = vmatmul.mubr.f32.gmra.mrb[0].mxu0 %v360
        %v493 = vpop.f32.mrb[0].mxu0
        %v494 = vadd.f32 %v326, %v493
        %v495 = vpop.f32.mrb[0].mxu0
        %496 = vmatprep.mubr.f32.mxu0 0.0
        %497 = vmatmul.mubr.f32.gmra.mrb[0].mxu0 %v363
        %v498 = vpop.f32.mrb[0].mxu0
        %v499 = vadd.f32 %v326, %v498
        %v500 = vpop.f32.mrb[0].mxu0
        %501 = vmatprep.mubr.f32.mxu0 0.0
        %502 = vmatmul.mubr.f32.gmra.mrb[0].mxu0 %v366
        %v503 = vpop.f32.mrb[0].mxu0
        %v504 = vadd.f32 %v326, %v503
        %v505 = vpop.f32.mrb[0].mxu0
        %506 = vmatprep.mubr.f32.mxu0 0.0
        %507 = vmatmul.mubr.f32.gmra.mrb[0].mxu0 %v369
        %v508 = vpop.f32.mrb[0].mxu0
        %v509 = vadd.f32 %v326, %v508
        %v510 = vpop.f32.mrb[0].mxu0
        %511 = vmatprep.mubr.f32.mxu0 0.0
        %512 = vmatmul.mubr.f32.gmra.mrb[0].mxu0 %v372
        %v513 = vpop.f32.mrb[0].mxu0
        %v514 = vadd.f32 %v326, %v513
        %v515 = vpop.f32.mrb[0].mxu0
        %516 = vmatprep.mubr.f32.mxu0 0.0
        %517 = vmatmul.mubr.f32.gmra.mrb[0].mxu0 %v375
        %v518 = vpop.f32.mrb[0].mxu0
        %v519 = vadd.f32 %v326, %v518
        %v520 = vpop.f32.mrb[0].mxu0
        %521 = vdwg.mxu0
        %v522 = vpack.c.bf16 %v449, %v444
        %v523 = vpack.c.bf16 %v459, %v454
        %v524 = vpack.c.bf16 %v469, %v464
        %v525 = vpack.c.bf16 %v479, %v474
        %v526 = vpack.c.bf16 %v489, %v484
        %v527 = vpack.c.bf16 %v499, %v494
        %v528 = vpack.c.bf16 %v509, %v504
        %v529 = vpack.c.bf16 %v519, %v514
        %v538 = vunpack.c.l.b16 %v522
        %v539 = vunpack.c.h.b16 %v522
        %v540 = vunpack.c.l.b16 %v523
        %v541 = vunpack.c.h.b16 %v523
        %v542 = vunpack.c.l.b16 %v524
        %v543 = vunpack.c.h.b16 %v524
        %v544 = vunpack.c.l.b16 %v525
        %v545 = vunpack.c.h.b16 %v525
        %v546 = vunpack.c.l.b16 %v526
        %v547 = vunpack.c.h.b16 %v526
        %v548 = vunpack.c.l.b16 %v527
        %v549 = vunpack.c.h.b16 %v527
        %v550 = vunpack.c.l.b16 %v528
        %v551 = vunpack.c.h.b16 %v528
        %v552 = vunpack.c.l.b16 %v529
        %v553 = vunpack.c.h.b16 %v529
        %v554 = vpack.c.b16 %v538, %v538
        %v555 = vpack.c.b16 %v539, %v539
        %v556 = vpack.c.b16 %v540, %v540
        %v557 = vpack.c.b16 %v541, %v541
        %v558 = vpack.c.b16 %v542, %v542
        %v559 = vpack.c.b16 %v543, %v543
        %v560 = vpack.c.b16 %v544, %v544
        %v561 = vpack.c.b16 %v545, %v545
        %v562 = vpack.c.b16 %v546, %v546
        %v563 = vpack.c.b16 %v547, %v547
        %v564 = vpack.c.b16 %v548, %v548
        %v565 = vpack.c.b16 %v549, %v549
        %v566 = vpack.c.b16 %v550, %v550
        %v567 = vpack.c.b16 %v551, %v551
        %v568 = vpack.c.b16 %v552, %v552
        %v569 = vpack.c.b16 %v553, %v553
        %586 = vst [vmem:[%s276] sm:$0xf] %v554
        %587 = vst [vmem:[%s276 + $0x4] sm:$0xf] %v555
        %588 = vst [vmem:[%s276 + $0x8] sm:$0xf] %v556
        %589 = vst [vmem:[%s276 + $0xc] sm:$0xf] %v557
        %590 = vst [vmem:[%s276 + $0x10] sm:$0xf] %v558
        %591 = vst [vmem:[%s276 + $0x14] sm:$0xf] %v559
        %592 = vst [vmem:[%s276 + $0x18] sm:$0xf] %v560
        %593 = vst [vmem:[%s276 + $0x1c] sm:$0xf] %v561
        %594 = vst [vmem:[%s276 + $0x20] sm:$0xf] %v562
        %595 = vst [vmem:[%s276 + $0x24] sm:$0xf] %v563
        %596 = vst [vmem:[%s276 + $0x28] sm:$0xf] %v564
        %597 = vst [vmem:[%s276 + $0x2c] sm:$0xf] %v565
        %598 = vst [vmem:[%s276 + $0x30] sm:$0xf] %v566
        %599 = vst [vmem:[%s276 + $0x34] sm:$0xf] %v567
        %600 = vst [vmem:[%s276 + $0x38] sm:$0xf] %v568
        %601 = vst [vmem:[%s276 + $0x3c] sm:$0xf] %v569
        %v602 = vld [vmem:[%s4] sm:$0xff]
        %v603 = vld [vmem:[%s4 + $0x8] sm:$0xff]
        %v604 = vld [vmem:[%s4 + $0x10] sm:$0xff]
        %v605 = vld [vmem:[%s4 + $0x18] sm:$0xff]
        %v606 = vld [vmem:[%s4 + $0x20] sm:$0xff]
        %v607 = vld [vmem:[%s4 + $0x28] sm:$0xff]
        %v608 = vld [vmem:[%s4 + $0x30] sm:$0xff]
        %v609 = vld [vmem:[%s4 + $0x38] sm:$0xff]
        %v610 = vld [vmem:[%s4 + $0x40] sm:$0xff]
        %v611 = vld [vmem:[%s4 + $0x48] sm:$0xff]
        %v612 = vld [vmem:[%s4 + $0x50] sm:$0xff]
        %v613 = vld [vmem:[%s4 + $0x58] sm:$0xff]
        %v614 = vld [vmem:[%s4 + $0x60] sm:$0xff]
        %v615 = vld [vmem:[%s4 + $0x68] sm:$0xff]
        %v616 = vld [vmem:[%s4 + $0x70] sm:$0xff]
        %v617 = vld [vmem:[%s4 + $0x78] sm:$0xff]
        %618 = vmatprep.subr.mxu0 0.0
        %619 = vmatpush1.msra.mxu0 %v602
        %620 = vmatprep.subr.mxu0 0.0
        %621 = vmatpush1.msra.mxu0 %v603
        %622 = vmatprep.subr.mxu0 0.0
        %623 = vmatpush1.msra.mxu0 %v604
        %624 = vmatprep.subr.mxu0 0.0
        %625 = vmatpush1.msra.mxu0 %v605
        %626 = vmatprep.subr.mxu0 0.0
        %627 = vmatpush1.msra.mxu0 %v606
        %628 = vmatprep.subr.mxu0 0.0
        %629 = vmatpush1.msra.mxu0 %v607
        %630 = vmatprep.subr.mxu0 0.0
        %631 = vmatpush1.msra.mxu0 %v608
        %632 = vmatprep.subr.mxu0 0.0
        %633 = vmatpush1.msra.mxu0 %v609
        %634 = vmatprep.subr.mxu0 0.0
        %635 = vmatpush1.msra.mxu0 %v610
        %636 = vmatprep.subr.mxu0 0.0
        %637 = vmatpush1.msra.mxu0 %v611
        %638 = vmatprep.subr.mxu0 0.0
        %639 = vmatpush1.msra.mxu0 %v612
        %640 = vmatprep.subr.mxu0 0.0
        %641 = vmatpush1.msra.mxu0 %v613
        %642 = vmatprep.subr.mxu0 0.0
        %643 = vmatpush1.msra.mxu0 %v614
        %644 = vmatprep.subr.mxu0 0.0
        %645 = vmatpush1.msra.mxu0 %v615
        %646 = vmatprep.subr.mxu0 0.0
        %647 = vmatpush1.msra.mxu0 %v616
        %648 = vmatprep.subr.mxu0 0.0
        %649 = vmatpush1.msra.mxu0 %v617
        %650 = vmatprep.subr.mxu0 0.0
        %651 = vmatpush1.msra.mxu0 0.0
        %652 = vmatprep.subr.mxu0 0.0
        %653 = vmatpush1.msra.mxu0 0.0
        %654 = vmatprep.subr.mxu0 0.0
        %655 = vmatpush1.msra.mxu0 0.0
        %656 = vmatprep.subr.mxu0 0.0
        %657 = vmatpush1.msra.mxu0 0.0
        %658 = vmatprep.subr.mxu0 0.0
        %659 = vmatpush1.msra.mxu0 0.0
        %660 = vmatprep.subr.mxu0 0.0
        %661 = vmatpush1.msra.mxu0 0.0
        %662 = vmatprep.subr.mxu0 0.0
        %663 = vmatpush1.msra.mxu0 0.0
        %664 = vmatprep.subr.mxu0 0.0
        %665 = vmatpush1.msra.mxu0 0.0
        %666 = vmatprep.subr.mxu0 0.0
        %667 = vmatpush1.msra.mxu0 0.0
        %668 = vmatprep.subr.mxu0 0.0
        %669 = vmatpush1.msra.mxu0 0.0
        %670 = vmatprep.subr.mxu0 0.0
        %671 = vmatpush1.msra.mxu0 0.0
        %672 = vmatprep.subr.mxu0 0.0
        %673 = vmatpush1.msra.mxu0 0.0
        %674 = vmatprep.subr.mxu0 0.0
        %675 = vmatpush1.msra.mxu0 0.0
        %676 = vmatprep.subr.mxu0 0.0
        %677 = vmatpush1.msra.mxu0 0.0
        %678 = vmatprep.subr.mxu0 0.0
        %679 = vmatpush1.msra.mxu0 0.0
        %680 = vmatprep.subr.mxu0 0.0
        %681 = vmatpush1.msra.mxu0 0.0
        %682 = vmatprep.mubr.f32.mxu0 0.0
        %683 = vmatmul.mubr.f32.gmra.mrb[0].mxu0 %v444
        %v684 = vpop.f32.mrb[0].mxu0
        %v685 = vadd.f32 0.0, %v684
        %v686 = vpop.f32.mrb[0].mxu0
        %687 = vmatprep.mubr.f32.mxu0 0.0
        %688 = vmatmul.mubr.f32.gmra.mrb[0].mxu0 %v449
        %v689 = vpop.f32.mrb[0].mxu0
        %v690 = vadd.f32 0.0, %v689
        %v691 = vpop.f32.mrb[0].mxu0
        %692 = vmatprep.mubr.f32.mxu0 0.0
        %693 = vmatmul.mubr.f32.gmra.mrb[0].mxu0 %v454
        %v694 = vpop.f32.mrb[0].mxu0
        %v695 = vadd.f32 0.0, %v694
        %v696 = vpop.f32.mrb[0].mxu0
        %697 = vmatprep.mubr.f32.mxu0 0.0
        %698 = vmatmul.mubr.f32.gmra.mrb[0].mxu0 %v459
        %v699 = vpop.f32.mrb[0].mxu0
        %v700 = vadd.f32 0.0, %v699
        %v701 = vpop.f32.mrb[0].mxu0
        %702 = vmatprep.mubr.f32.mxu0 0.0
        %703 = vmatmul.mubr.f32.gmra.mrb[0].mxu0 %v464
        %v704 = vpop.f32.mrb[0].mxu0
        %v705 = vadd.f32 0.0, %v704
        %v706 = vpop.f32.mrb[0].mxu0
        %707 = vmatprep.mubr.f32.mxu0 0.0
        %708 = vmatmul.mubr.f32.gmra.mrb[0].mxu0 %v469
        %v709 = vpop.f32.mrb[0].mxu0
        %v710 = vadd.f32 0.0, %v709
        %v711 = vpop.f32.mrb[0].mxu0
        %712 = vmatprep.mubr.f32.mxu0 0.0
        %713 = vmatmul.mubr.f32.gmra.mrb[0].mxu0 %v474
        %v714 = vpop.f32.mrb[0].mxu0
        %v715 = vadd.f32 0.0, %v714
        %v716 = vpop.f32.mrb[0].mxu0
        %717 = vmatprep.mubr.f32.mxu0 0.0
        %718 = vmatmul.mubr.f32.gmra.mrb[0].mxu0 %v479
        %v719 = vpop.f32.mrb[0].mxu0
        %v720 = vadd.f32 0.0, %v719
        %v721 = vpop.f32.mrb[0].mxu0
        %722 = vmatprep.mubr.f32.mxu0 0.0
        %723 = vmatmul.mubr.f32.gmra.mrb[0].mxu0 %v484
        %v724 = vpop.f32.mrb[0].mxu0
        %v725 = vadd.f32 0.0, %v724
        %v726 = vpop.f32.mrb[0].mxu0
        %727 = vmatprep.mubr.f32.mxu0 0.0
        %728 = vmatmul.mubr.f32.gmra.mrb[0].mxu0 %v489
        %v729 = vpop.f32.mrb[0].mxu0
        %v730 = vadd.f32 0.0, %v729
        %v731 = vpop.f32.mrb[0].mxu0
        %732 = vmatprep.mubr.f32.mxu0 0.0
        %733 = vmatmul.mubr.f32.gmra.mrb[0].mxu0 %v494
        %v734 = vpop.f32.mrb[0].mxu0
        %v735 = vadd.f32 0.0, %v734
        %v736 = vpop.f32.mrb[0].mxu0
        %737 = vmatprep.mubr.f32.mxu0 0.0
        %738 = vmatmul.mubr.f32.gmra.mrb[0].mxu0 %v499
        %v739 = vpop.f32.mrb[0].mxu0
        %v740 = vadd.f32 0.0, %v739
        %v741 = vpop.f32.mrb[0].mxu0
        %742 = vmatprep.mubr.f32.mxu0 0.0
        %743 = vmatmul.mubr.f32.gmra.mrb[0].mxu0 %v504
        %v744 = vpop.f32.mrb[0].mxu0
        %v745 = vadd.f32 0.0, %v744
        %v746 = vpop.f32.mrb[0].mxu0
        %747 = vmatprep.mubr.f32.mxu0 0.0
        %748 = vmatmul.mubr.f32.gmra.mrb[0].mxu0 %v509
        %v749 = vpop.f32.mrb[0].mxu0
        %v750 = vadd.f32 0.0, %v749
        %v751 = vpop.f32.mrb[0].mxu0
        %752 = vmatprep.mubr.f32.mxu0 0.0
        %753 = vmatmul.mubr.f32.gmra.mrb[0].mxu0 %v514
        %v754 = vpop.f32.mrb[0].mxu0
        %v755 = vadd.f32 0.0, %v754
        %v756 = vpop.f32.mrb[0].mxu0
        %757 = vmatprep.mubr.f32.mxu0 0.0
        %758 = vmatmul.mubr.f32.gmra.mrb[0].mxu0 %v519
        %v759 = vpop.f32.mrb[0].mxu0
        %v760 = vadd.f32 0.0, %v759
        %v761 = vpop.f32.mrb[0].mxu0
        %762 = vdwg.mxu0
        %vm763 = vcmask 7168
        %764 = vst.msk [vmem:[%s301] sm:$0xff] %vm763, %v685
        %765 = vst.msk [vmem:[%s301 + $0x8] sm:$0xff] %vm763, %v690
        %766 = vst.msk [vmem:[%s301 + $0x10] sm:$0xff] %vm763, %v695
        %767 = vst.msk [vmem:[%s301 + $0x18] sm:$0xff] %vm763, %v700
        %768 = vst.msk [vmem:[%s301 + $0x20] sm:$0xff] %vm763, %v705
        %769 = vst.msk [vmem:[%s301 + $0x28] sm:$0xff] %vm763, %v710
        %770 = vst.msk [vmem:[%s301 + $0x30] sm:$0xff] %vm763, %v715
        %771 = vst.msk [vmem:[%s301 + $0x38] sm:$0xff] %vm763, %v720
        %772 = vst.msk [vmem:[%s301 + $0x40] sm:$0xff] %vm763, %v725
        %773 = vst.msk [vmem:[%s301 + $0x48] sm:$0xff] %vm763, %v730
        %774 = vst.msk [vmem:[%s301 + $0x50] sm:$0xff] %vm763, %v735
        %775 = vst.msk [vmem:[%s301 + $0x58] sm:$0xff] %vm763, %v740
        %776 = vst.msk [vmem:[%s301 + $0x60] sm:$0xff] %vm763, %v745
        %777 = vst.msk [vmem:[%s301 + $0x68] sm:$0xff] %vm763, %v750
        %778 = vst.msk [vmem:[%s301 + $0x70] sm:$0xff] %vm763, %v755
        %779 = vst.msk [vmem:[%s301 + $0x78] sm:$0xff] %vm763, %v760
        %v780 = vld [vmem:[%s3] sm:$0x1]
        %781 = vmatprep.subr.mxu0 0.0
        %782 = vmatpush1.xpose.msra.mxu0 %v444
        %783 = vmatprep.subr.mxu0 0.0
        %784 = vmatpush1.xpose.msra.mxu0 %v449
        %785 = vmatprep.subr.mxu0 0.0
        %786 = vmatpush1.xpose.msra.mxu0 %v454
        %787 = vmatprep.subr.mxu0 0.0
        %788 = vmatpush1.xpose.msra.mxu0 %v459
        %789 = vmatprep.subr.mxu0 0.0
        %790 = vmatpush1.xpose.msra.mxu0 %v464
        %791 = vmatprep.subr.mxu0 0.0
        %792 = vmatpush1.xpose.msra.mxu0 %v469
        %793 = vmatprep.subr.mxu0 0.0
        %794 = vmatpush1.xpose.msra.mxu0 %v474
        %795 = vmatprep.subr.mxu0 0.0
        %796 = vmatpush1.xpose.msra.mxu0 %v479
        %797 = vmatprep.subr.mxu0 0.0
        %798 = vmatpush1.xpose.msra.mxu0 %v484
        %799 = vmatprep.subr.mxu0 0.0
        %800 = vmatpush1.xpose.msra.mxu0 %v489
        %801 = vmatprep.subr.mxu0 0.0
        %802 = vmatpush1.xpose.msra.mxu0 %v494
        %803 = vmatprep.subr.mxu0 0.0
        %804 = vmatpush1.xpose.msra.mxu0 %v499
        %805 = vmatprep.subr.mxu0 0.0
        %806 = vmatpush1.xpose.msra.mxu0 %v504
        %807 = vmatprep.subr.mxu0 0.0
        %808 = vmatpush1.xpose.msra.mxu0 %v509
        %809 = vmatprep.subr.mxu0 0.0
        %810 = vmatpush1.xpose.msra.mxu0 %v514
        %811 = vmatprep.subr.mxu0 0.0
        %812 = vmatpush1.xpose.msra.mxu0 %v519
        %813 = vmatprep.subr.mxu0 0.0
        %814 = vmatpush1.xpose.msra.mxu0 0.0
        %815 = vmatprep.subr.mxu0 0.0
        %816 = vmatpush1.xpose.msra.mxu0 0.0
        %817 = vmatprep.subr.mxu0 0.0
        %818 = vmatpush1.xpose.msra.mxu0 0.0
        %819 = vmatprep.subr.mxu0 0.0
        %820 = vmatpush1.xpose.msra.mxu0 0.0
        %821 = vmatprep.subr.mxu0 0.0
        %822 = vmatpush1.xpose.msra.mxu0 0.0
        %823 = vmatprep.subr.mxu0 0.0
        %824 = vmatpush1.xpose.msra.mxu0 0.0
        %825 = vmatprep.subr.mxu0 0.0
        %826 = vmatpush1.xpose.msra.mxu0 0.0
        %827 = vmatprep.subr.mxu0 0.0
        %828 = vmatpush1.xpose.msra.mxu0 0.0
        %829 = vmatprep.subr.mxu0 0.0
        %830 = vmatpush1.xpose.msra.mxu0 0.0
        %831 = vmatprep.subr.mxu0 0.0
        %832 = vmatpush1.xpose.msra.mxu0 0.0
        %833 = vmatprep.subr.mxu0 0.0
        %834 = vmatpush1.xpose.msra.mxu0 0.0
        %835 = vmatprep.subr.mxu0 0.0
        %836 = vmatpush1.xpose.msra.mxu0 0.0
        %837 = vmatprep.subr.mxu0 0.0
        %838 = vmatpush1.xpose.msra.mxu0 0.0
        %839 = vmatprep.subr.mxu0 0.0
        %840 = vmatpush1.xpose.msra.mxu0 0.0
        %841 = vmatprep.subr.mxu0 0.0
        %842 = vmatpush1.xpose.msra.mxu0 0.0
        %843 = vmatprep.subr.mxu0 0.0
        %844 = vmatpush1.xpose.msra.mxu0 0.0
        %845 = vmatprep.mubr.f32.mxu0 0.0
        %846 = vmatmul.mubr.f32.gmra.mrb[0].mxu0 %v780
        %v847 = vpop.f32.mrb[0].mxu0
        %v848 = vadd.f32 0.0, %v847
        %v849 = vpop.f32.mrb[0].mxu0
        %850 = vdwg.mxu0
        %851 = vst [vmem:[%s282] sm:$0x1] %v848
        %s852 = sand.u32 %s143, 1
        %s853 = scalar_lea.sflag [#allocation3], %s852
        %s854 = sand.u32 %s143, 1
        %s855 = smul.addr %s854, 64
        %s856 = scalar_lea.vmem [#allocation2], %s855
        %s857 = sand.u32 %s169, 1
        %s858 = scalar_lea.sflag [#allocation5], %s857
        %s859 = sand.u32 %s169, 1
        %s860 = scalar_lea.vmem [#allocation4], %s859
        %s861 = smul.u32 16, %s25
        %p862 = scmp.lt.s32.totalorder %s861, 63
        %s863 = scalar_select %p862, %s861, 63
        %s864 = smul.addr %s863, 8
        %s865 = scalar_lea.vmem %s7, %s864
        // Predicated region
        $region41: #{tpu_custom_call.1} parent=39 // pred_check
          %p866 = pneg %p153
        $region42: #{tpu_custom_call.1} parent=39 // pred_check_branch
          %868 = sbr.rel (%p866) target = $region44
        $region43: #{tpu_custom_call.1} parent=39 // pred_region
          %s869 = smul.u32 16, %s25
          %s871 = ssub.s32 1024, 1024
          %872 = vsyncadd %s853, %s871
          %s873 = smul.addr %s869, 64
          %s874 = scalar_lea.hbm %s5, %s873
          %s875 = sshll.u32 %s856, 4
          %s876 = int_to_ptr.vmem [resolvable:$true] %s875
          %881 = dma.vmem_to_hbm [thread:$0]  %s876, 1024, %s874, %s853, 64, 64, 4
        $region44: #{tpu_custom_call.1} parent=39 // pred_fallthru
          _
        // Predicated region
        $region45: #{tpu_custom_call.1} parent=39 // pred_check
          %p882 = pneg %p179
        $region46: #{tpu_custom_call.1} parent=39 // pred_check_branch
          %884 = sbr.rel (%p882) target = $region48
        $region47: #{tpu_custom_call.1} parent=39 // pred_region
          %s886 = ssub.s32 16, 16
          %887 = vsyncadd %s858, %s886
          %s888 = smul.addr %s25, 16
          %s889 = scalar_lea.hbm %s6, %s888
          %s891 = sshll.u32 %s860, 4
          %s892 = int_to_ptr.vmem [resolvable:$true] %s891
          %894 = dma.vmem_to_hbm [thread:$0]  %s892, 16, %s889, %s858
        $region48: #{tpu_custom_call.1} parent=39 // pred_fallthru
          _
        // Predicated region
        $region49: #{tpu_custom_call.1} parent=39 // pred_check
          %p895 = pneg %p205
        $region50: #{tpu_custom_call.1} parent=39 // pred_check_branch
          %897 = sbr.rel (%p895) target = $region52
        $region51: #{tpu_custom_call.1} parent=39 // pred_region
          %s898 = smul.u32 16, %s25
        $region52: #{tpu_custom_call.1} parent=39 // pred_fallthru
          _
      $region40: #{tpu_custom_call.1} parent=5 // pred_fallthru
        _
      %p899 = scmp.le.s32.totalorder 2, %s20
      // Predicated region
      $region53: #{tpu_custom_call.1} parent=5 // pred_check
        %p900 = pneg %p899
      $region54: #{tpu_custom_call.1} parent=5 // pred_check_branch
        %902 = sbr.rel (%p900) target = $region56
      $region55: #{tpu_custom_call.1} parent=5 // pred_region
        %s903 = ssub.s32 %s20, 2
        // Predicated region
        $region57: #{tpu_custom_call.1} parent=55 // pred_check
          %p904 = pneg %p159
        $region58: #{tpu_custom_call.1} parent=55 // pred_check_branch
          %906 = sbr.rel (%p904) target = $region60
        $region59: #{tpu_custom_call.1} parent=55 // pred_region
          %s907 = sand.u32 %s144, 1
          %s908 = scalar_lea.sflag [#allocation3], %s907
          %s909 = sand.u32 %s144, 1
          %s910 = smul.addr %s909, 64
          %s911 = scalar_lea.vmem [#allocation2], %s910
          %912 = dma.done %s908, 1024
        $region60: #{tpu_custom_call.1} parent=55 // pred_fallthru
          _
        // Predicated region
        $region61: #{tpu_custom_call.1} parent=55 // pred_check
          %p913 = pneg %p185
        $region62: #{tpu_custom_call.1} parent=55 // pred_check_branch
          %915 = sbr.rel (%p913) target = $region64
        $region63: #{tpu_custom_call.1} parent=55 // pred_region
          %s916 = sand.u32 %s170, 1
          %s917 = scalar_lea.sflag [#allocation5], %s916
          %s918 = sand.u32 %s170, 1
          %s919 = scalar_lea.vmem [#allocation4], %s918
          %920 = dma.done %s917, 16
        $region64: #{tpu_custom_call.1} parent=55 // pred_fallthru
          _
        // Predicated region
        $region65: #{tpu_custom_call.1} parent=55 // pred_check
          %p921 = pneg %p211
        $region66: #{tpu_custom_call.1} parent=55 // pred_check_branch
          %923 = sbr.rel (%p921) target = $region68
        $region67: #{tpu_custom_call.1} parent=55 // pred_region
          %s924 = smul.u32 16, %s26
          %p925 = scmp.lt.s32.totalorder %s924, 63
          %s926 = scalar_select %p925, %s924, 63
          %s927 = smul.addr %s926, 8
          %s928 = scalar_lea.vmem %s7, %s927
        $region68: #{tpu_custom_call.1} parent=55 // pred_fallthru
          _
      $region56: #{tpu_custom_call.1} parent=5 // pred_fallthru
        _
    $region6: #{tpu_custom_call.1} parent=1 // loop_footer
      %s24 = sadd.s32 1, %s20
    $region7: #{tpu_custom_call.1} parent=1 // loop_footer_branch
      %19 = sbr.rel target = $region3
    $region8: #{tpu_custom_call.1} parent=1 // loop_exit
      _
    %929 = vsyncpa [#allocation3], 1
    %s930 = scalar_lea.sflag [#allocation3], 1
    %931 = vsyncpa %s930, 1
    %932 = vsyncpa [#allocation5], 1
    %s933 = scalar_lea.sflag [#allocation5], 1
    %934 = vsyncpa %s933, 1

</llo_original>
